<compile_context>
chip_gen: v7x
topology: tpu7x:2x2x1
jax: 0.10.0
libtpu: 0.0.40
codegen_flags: <defaults>
</compile_context>

<pallas_src>
import jax
import jax.numpy as jnp
from jax.experimental import pallas as pl
from jax.experimental.pallas import tpu as pltpu

TINY_NUMBER = 1e-6  # same constant GNT uses in img2mse

_LANES = 128
_BLOCK_ROWS = 512   # rows per grid step in the tiled path (512*384*4B = 768 KiB/input)
_NUM_PARTS = 2      # reduction split across TensorCores for very large inputs
_SUBLANES = 8       # rows reserved per part in the partial-sum output


# ---------------------------------------------------------------------------
# Kernels. Grid = (parts, steps): "parallel" over parts, "arbitrary"
# (reduction) over steps.  The (8, lane_w) output block is resident across the
# step axis and acts as a per-lane accumulator (zeroed at step 0, written back
# automatically when the part index changes / the grid ends).  Only row 0 of
# the block is actually accumulated into; rows 1..7 stay zero.
# ---------------------------------------------------------------------------
def _sq_sum_kernel(p_ref, g_ref, out_ref):
    @pl.when(pl.program_id(1) == 0)
    def _():
        out_ref[...] = jnp.zeros_like(out_ref)

    d = p_ref[...].astype(jnp.float32) - g_ref[...].astype(jnp.float32)
    out_ref[0:1, :] += jnp.sum(d * d, axis=0, keepdims=True)


def _masked_sq_sum_kernel(p_ref, g_ref, m_ref, sq_ref, msum_ref):
    @pl.when(pl.program_id(1) == 0)
    def _():
        sq_ref[...] = jnp.zeros_like(sq_ref)
        msum_ref[...] = jnp.zeros_like(msum_ref)

    p = p_ref[...].astype(jnp.float32)
    g = g_ref[...].astype(jnp.float32)
    m = m_ref[...].astype(jnp.float32)
    d = p - g
    sq_ref[0:1, :] += jnp.sum(d * d * m, axis=0, keepdims=True)
    msum_ref[0:1, :] += jnp.sum(m, axis=0, keepdims=True)


# ---------------------------------------------------------------------------
# Wrapper helpers
# ---------------------------------------------------------------------------
def _lane_dense_view(flat_arrays, n_elems, lane_w):
    """Reshape 1-D arrays into a shared lane-dense [rows, lane_w] view.

    Zero-pads only when needed (padded elements contribute 0 to every sum).
    Returns (views, num_parts, steps, block_rows).
    """
    rows0 = pl.cdiv(n_elems, lane_w)
    if rows0 <= _BLOCK_ROWS:
        num_parts, steps, block_rows = 1, 1, rows0          # single grid step
    else:
        block_rows = _BLOCK_ROWS
        num_parts = _NUM_PARTS
        steps = pl.cdiv(rows0, block_rows * num_parts)
    rows = num_parts * steps * block_rows
    pad = rows * lane_w - n_elems

    views = []
    for a in flat_arrays:
        if pad:
            a = jnp.pad(a, (0, pad))
        views.append(a.reshape(rows, lane_w))
    return views, num_parts, steps, block_rows


def _sq_sum(p2, g2, num_parts, steps, block_rows, lane_w):
    in_map = lambda part, step: (part * steps + step, 0)
    out_map = lambda part, step: (part, 0)
    partial = pl.pallas_call(
        _sq_sum_kernel,
        out_shape=jax.ShapeDtypeStruct((num_parts * _SUBLANES, lane_w), jnp.float32),
        grid_spec=pltpu.PrefetchScalarGridSpec(
            num_scalar_prefetch=0,
            grid=(num_parts, steps),
            in_specs=[
                pl.BlockSpec((block_rows, lane_w), in_map),
                pl.BlockSpec((block_rows, lane_w), in_map),
            ],
            out_specs=pl.BlockSpec((_SUBLANES, lane_w), out_map),
        ),
        compiler_params=pltpu.CompilerParams(
            dimension_semantics=("parallel", "arbitrary")),
    )(p2, g2)
    return jnp.sum(partial)


def _masked_sq_sum(p2, g2, m2, num_parts, steps, block_rows, lane_w):
    in_map = lambda part, step: (part * steps + step, 0)
    out_map = lambda part, step: (part, 0)
    sq_partial, m_partial = pl.pallas_call(
        _masked_sq_sum_kernel,
        out_shape=(
            jax.ShapeDtypeStruct((num_parts * _SUBLANES, lane_w), jnp.float32),
            jax.ShapeDtypeStruct((num_parts * _SUBLANES, lane_w), jnp.float32),
        ),
        grid_spec=pltpu.PrefetchScalarGridSpec(
            num_scalar_prefetch=0,
            grid=(num_parts, steps),
            in_specs=[
                pl.BlockSpec((block_rows, lane_w), in_map),
                pl.BlockSpec((block_rows, lane_w), in_map),
                pl.BlockSpec((block_rows, lane_w), in_map),
            ],
            out_specs=[
                pl.BlockSpec((_SUBLANES, lane_w), out_map),
                pl.BlockSpec((_SUBLANES, lane_w), out_map),
            ],
        ),
        compiler_params=pltpu.CompilerParams(
            dimension_semantics=("parallel", "arbitrary")),
    )(p2, g2, m2)
    return jnp.sum(sq_partial), jnp.sum(m_partial)


def img2mse(pred, gt, mask=None):
    """Pallas-backed equivalent of GNT's img2mse."""
    pred = jnp.asarray(pred)
    gt = jnp.asarray(gt)
    c = pred.shape[-1]
    n_elems = pred.size
    # lane width: a multiple of 128; 128*C means each row covers 128 rays,
    # so no padding is needed whenever the ray count is a multiple of 128.
    lane_w = min(_LANES * c, 4 * _LANES)

    pred_f = pred.reshape(-1)   # free, contiguous
    gt_f = gt.reshape(-1)

    if mask is None:
        (p2, g2), num_parts, steps, block_rows = _lane_dense_view(
            [pred_f, gt_f], n_elems, lane_w)
        sq_sum = _sq_sum(p2, g2, num_parts, steps, block_rows, lane_w)
        return sq_sum / jnp.float32(n_elems)            # torch.mean((x - y)**2)

    # Expand the per-ray mask over channels so it aligns with the flattened
    # (channel-interleaved) pred/gt stream; sum(mask) is recovered as
    # sum(mask_expanded) / C.
    mask_f = jnp.repeat(mask.astype(jnp.float32).reshape(-1), c)
    (p2, g2, m2), num_parts, steps, block_rows = _lane_dense_view(
        [pred_f, gt_f, mask_f], n_elems, lane_w)
    sq_sum, m_exp_sum = _masked_sq_sum(
        p2, g2, m2, num_parts, steps, block_rows, lane_w)
    m_sum = m_exp_sum / jnp.float32(c)
    return sq_sum / (m_sum + TINY_NUMBER) / jnp.float32(c)


class Criterion:
    """JAX/Pallas port of gnt.criterion.Criterion (stateless)."""

    def __call__(self, outputs, ray_batch, scalars_to_log, key="rgb", key_gt=None):
        if key_gt is None:
            key_gt = key
        pred_rgb = outputs[key]
        pred_mask = outputs["mask"].astype(jnp.float32) if "mask" in outputs else None
        gt_rgb = ray_batch[key_gt]
        loss = img2mse(pred_rgb, gt_rgb, pred_mask)
        return loss, scalars_to_log


if __name__ == "__main__":
    key = jax.random.PRNGKey(0)
    k1, k2, k3 = jax.random.split(key, 3)
    n_rays, n_ch = 256, 3

    pred_rgb = jax.random.uniform(k1, (n_rays, n_ch), jnp.float32)
    gt_rgb = jax.random.uniform(k2, (n_rays, n_ch), jnp.float32)
    mask = (jax.random.uniform(k3, (n_rays,)) > 0.3).astype(jnp.float32)

    criterion = Criterion()

    # masked path
    loss_masked, _ = criterion({"rgb": pred_rgb, "mask": mask}, {"rgb": gt_rgb}, {})
    loss_masked = jax.block_until_ready(loss_masked)

    # unmasked path
    loss_plain, _ = criterion({"rgb": pred_rgb}, {"rgb": gt_rgb}, {})
    loss_plain = jax.block_until_ready(loss_plain)

    # plain-JAX references
    d2 = (pred_rgb - gt_rgb) ** 2
    ref_masked = jnp.sum(d2 * mask[:, None]) / (jnp.sum(mask) + TINY_NUMBER) / n_ch
    ref_plain = jnp.mean(d2)
    assert jnp.allclose(loss_masked, ref_masked, rtol=1e-5, atol=1e-6), (
        loss_masked, ref_masked)
    assert jnp.allclose(loss_plain, ref_plain, rtol=1e-5, atol=1e-6), (
        loss_plain, ref_plain)

    # ragged ray count (exercises the zero-pad fallback) with bf16 inputs
    # (kernel casts to f32 internally; no wrapper-side astype of pred/gt).
    n2 = 100
    p_bf = jax.random.uniform(k1, (n2, n_ch), jnp.bfloat16)
    g_bf = jax.random.uniform(k2, (n2, n_ch), jnp.bfloat16)
    loss_bf, _ = criterion({"rgb": p_bf}, {"rgb": g_bf}, {})
    loss_bf = jax.block_until_ready(loss_bf)
    ref_bf = jnp.mean((p_bf.astype(jnp.float32) - g_bf.astype(jnp.float32)) ** 2)
    assert jnp.allclose(loss_bf, ref_bf, rtol=1e-2, atol=1e-4), (loss_bf, ref_bf)

    # larger batch: exercises the tiled multi-step / two-part ("parallel")
    # reduction path in both kernels.
    n3 = 140_000
    k4, k5, k6 = jax.random.split(k3, 3)
    p_big = jax.random.uniform(k4, (n3, n_ch), jnp.float32)
    g_big = jax.random.uniform(k5, (n3, n_ch), jnp.float32)
    m_big = (jax.random.uniform(k6, (n3,)) > 0.5).astype(jnp.float32)

    loss_big_plain, _ = criterion({"rgb": p_big}, {"rgb": g_big}, {})
    loss_big_plain = jax.block_until_ready(loss_big_plain)
    loss_big_masked, _ = criterion(
        {"rgb": p_big, "mask": m_big}, {"rgb": g_big}, {})
    loss_big_masked = jax.block_until_ready(loss_big_masked)

    d2_big = (p_big - g_big) ** 2
    ref_big_plain = jnp.mean(d2_big)
    ref_big_masked = (jnp.sum(d2_big * m_big[:, None])
                      / (jnp.sum(m_big) + TINY_NUMBER) / n_ch)
    assert jnp.allclose(loss_big_plain, ref_big_plain, rtol=1e-5, atol=1e-6), (
        loss_big_plain, ref_big_plain)
    assert jnp.allclose(loss_big_masked, ref_big_masked, rtol=1e-5, atol=1e-6), (
        loss_big_masked, ref_big_masked)

    print("KERNEL_OK")
</pallas_src>

<mosaic_0001>
module attributes {stable_mosaic.version = 11 : i64} {
  func.func @_masked_sq_sum_kernel(%arg0: i32, %arg1: i32, %arg2: memref<2x384xf32, #tpu.memory_space<vmem>>, %arg3: memref<2x384xf32, #tpu.memory_space<vmem>>, %arg4: memref<2x384xf32, #tpu.memory_space<vmem>>, %arg5: memref<8x384xf32, #tpu.memory_space<vmem>>, %arg6: memref<8x384xf32, #tpu.memory_space<vmem>>) attributes {dimension_semantics = [#tpu.dimension_semantics<parallel>, #tpu.dimension_semantics<arbitrary>], iteration_bounds = array<i64: 1, 1>, scalar_prefetch = 0 : i64, scratch_operands = 0 : i64, tpu.core_type = #tpu.core_type<tc>, window_params = [{transform_indices = @transform_0, window_bounds = array<i64: 2, 384>}, {transform_indices = @transform_1, window_bounds = array<i64: 2, 384>}, {transform_indices = @transform_2, window_bounds = array<i64: 2, 384>}, {transform_indices = @transform_3, window_bounds = array<i64: 8, 384>}, {transform_indices = @transform_4, window_bounds = array<i64: 8, 384>}]} {
    %c0_i32 = arith.constant 0 : i32
    %0 = arith.cmpi eq, %arg1, %c0_i32 : i32
    %1 = arith.extui %0 : i1 to i32
    %c0_i32_0 = arith.constant 0 : i32
    %2 = arith.cmpi ne, %1, %c0_i32_0 : i32
    scf.if %2 {
      %cst_15 = arith.constant 0.000000e+00 : f32
      %19 = vector.broadcast %cst_15 : f32 to vector<8x384xf32>
      %c0_16 = arith.constant 0 : index
      %c0_17 = arith.constant 0 : index
      %20 = vector.load %arg5[%c0_16, %c0_17] : memref<8x384xf32, #tpu.memory_space<vmem>>, vector<8x384xf32>
      tpu.vector_store %arg5[%c0_16, %c0_17], %19 {strides = array<i32>} : memref<8x384xf32, #tpu.memory_space<vmem>>, vector<8x384xf32>,
      %cst_18 = arith.constant 0.000000e+00 : f32
      %21 = vector.broadcast %cst_18 : f32 to vector<8x384xf32>
      %c0_19 = arith.constant 0 : index
      %c0_20 = arith.constant 0 : index
      %22 = vector.load %arg6[%c0_19, %c0_20] : memref<8x384xf32, #tpu.memory_space<vmem>>, vector<8x384xf32>
      tpu.vector_store %arg6[%c0_19, %c0_20], %21 {strides = array<i32>} : memref<8x384xf32, #tpu.memory_space<vmem>>, vector<8x384xf32>,
    } else {
    }
    %c0 = arith.constant 0 : index
    %c0_1 = arith.constant 0 : index
    %3 = vector.load %arg2[%c0, %c0_1] : memref<2x384xf32, #tpu.memory_space<vmem>>, vector<2x384xf32>
    %c0_2 = arith.constant 0 : index
    %c0_3 = arith.constant 0 : index
    %4 = vector.load %arg3[%c0_2, %c0_3] : memref<2x384xf32, #tpu.memory_space<vmem>>, vector<2x384xf32>
    %c0_4 = arith.constant 0 : index
    %c0_5 = arith.constant 0 : index
    %5 = vector.load %arg4[%c0_4, %c0_5] : memref<2x384xf32, #tpu.memory_space<vmem>>, vector<2x384xf32>
    %6 = arith.subf %3, %4 : vector<2x384xf32>
    %c0_6 = arith.constant 0 : index
    %c0_7 = arith.constant 0 : index
    %7 = vector.load %arg5[%c0_6, %c0_7] : memref<8x384xf32, #tpu.memory_space<vmem>>, vector<1x384xf32>
    %8 = arith.mulf %6, %6 : vector<2x384xf32>
    %9 = arith.mulf %8, %5 : vector<2x384xf32>
    %cst = arith.constant dense<0.000000e+00> : vector<384xf32>
    %10 = vector.multi_reduction <add>, %9, %cst [0] : vector<2x384xf32> to vector<384xf32>
    %11 = vector.shape_cast %10 : vector<384xf32> to vector<1x384xf32>
    %12 = arith.addf %7, %11 : vector<1x384xf32>
    %c0_8 = arith.constant 0 : index
    %c0_9 = arith.constant 0 : index
    %13 = vector.load %arg5[%c0_8, %c0_9] : memref<8x384xf32, #tpu.memory_space<vmem>>, vector<1x384xf32>
    tpu.vector_store %arg5[%c0_8, %c0_9], %12 {strides = array<i32>} : memref<8x384xf32, #tpu.memory_space<vmem>>, vector<1x384xf32>,
    %c0_10 = arith.constant 0 : index
    %c0_11 = arith.constant 0 : index
    %14 = vector.load %arg6[%c0_10, %c0_11] : memref<8x384xf32, #tpu.memory_space<vmem>>, vector<1x384xf32>
    %cst_12 = arith.constant dense<0.000000e+00> : vector<384xf32>
    %15 = vector.multi_reduction <add>, %5, %cst_12 [0] : vector<2x384xf32> to vector<384xf32>
    %16 = vector.shape_cast %15 : vector<384xf32> to vector<1x384xf32>
    %17 = arith.addf %14, %16 : vector<1x384xf32>
    %c0_13 = arith.constant 0 : index
    %c0_14 = arith.constant 0 : index
    %18 = vector.load %arg6[%c0_13, %c0_14] : memref<8x384xf32, #tpu.memory_space<vmem>>, vector<1x384xf32>
    tpu.vector_store %arg6[%c0_13, %c0_14], %17 {strides = array<i32>} : memref<8x384xf32, #tpu.memory_space<vmem>>, vector<1x384xf32>,
    return
  }
  func.func @transform_0(%arg0: i32, %arg1: i32) -> (i32, i32) {
    %c1_i32 = arith.constant 1 : i32
    %0 = arith.muli %arg0, %c1_i32 : i32
    %1 = arith.addi %0, %arg1 : i32
    %c0_i32 = arith.constant 0 : i32
    %c0_i32_0 = arith.constant 0 : i32
    return %1, %c0_i32 : i32, i32
  }
  func.func @transform_1(%arg0: i32, %arg1: i32) -> (i32, i32) {
    %c1_i32 = arith.constant 1 : i32
    %0 = arith.muli %arg0, %c1_i32 : i32
    %1 = arith.addi %0, %arg1 : i32
    %c0_i32 = arith.constant 0 : i32
    %c0_i32_0 = arith.constant 0 : i32
    return %1, %c0_i32 : i32, i32
  }
  func.func @transform_2(%arg0: i32, %arg1: i32) -> (i32, i32) {
    %c1_i32 = arith.constant 1 : i32
    %0 = arith.muli %arg0, %c1_i32 : i32
    %1 = arith.addi %0, %arg1 : i32
    %c0_i32 = arith.constant 0 : i32
    %c0_i32_0 = arith.constant 0 : i32
    return %1, %c0_i32 : i32, i32
  }
  func.func @transform_3(%arg0: i32, %arg1: i32) -> (i32, i32) {
    %c0_i32 = arith.constant 0 : i32
    %c0_i32_0 = arith.constant 0 : i32
    return %arg0, %c0_i32 : i32, i32
  }
  func.func @transform_4(%arg0: i32, %arg1: i32) -> (i32, i32) {
    %c0_i32 = arith.constant 0 : i32
    %c0_i32_0 = arith.constant 0 : i32
    return %arg0, %c0_i32 : i32, i32
  }
}

</mosaic_0001>

<llo_original>
// kernel: tpu_custom_call.1
$region0: #{tpu_custom_call.1}
  #allocation0 [shape = 'u32[]', space=smem, size = 0x4, offset = 0x4, fixed_abs, tag = 'smem constant byte address 0x4 - core index']
  #allocation1 [shape = 'u32[144,128]{1,0:T(1,128)}', space=vmem, size = 0x12000, scoped, tag = 'internal scratch']
  %s0 = inlined_call_operand.hbm [shape: f32[2,384], index: 0, kind: input, shape index: {}]
  %s1 = inlined_call_operand.hbm [shape: f32[2,384], index: 1, kind: input, shape index: {}]
  %s2 = inlined_call_operand.vmem [shape: f32[2,384], index: 2, kind: input, shape index: {}]
  %s3 = inlined_call_operand.hbm [shape: f32[8,384], index: 3, kind: output, shape index: {0}]
  %s4 = inlined_call_operand.hbm [shape: f32[8,384], index: 4, kind: output, shape index: {1}]
  %5 = xla_tuple %s3, %s4
  %s6 = sld [smem:[#allocation0]]
  $region42: #{tpu_custom_call.1} parent=0
    _
  %s8 = ssub.s32 1, %s6
  %s9 = scalar_select 0, %s8, %s6
  $region1: #{tpu_custom_call.1} parent=0
    #allocation2 [shape = 'u8[3072]{0}', space=vmem, size = 0xc00, scoped, tag = 'input window, operand 0, single buffered']
    #allocation3 [shape = 's32[1]{0}', space=sflag, size = 0x4, scoped, tag = 'scoped memory for tpu_custom_call.1']
    #allocation4 [shape = 's32[1]{0}', space=sflag, size = 0x4, scoped, tag = 'scoped memory for tpu_custom_call.1']
    #allocation5 [shape = 'u8[3072]{0}', space=vmem, size = 0xc00, scoped, tag = 'input window, operand 1, single buffered']
    #allocation6 [shape = 's32[1]{0}', space=sflag, size = 0x4, scoped, tag = 'scoped memory for tpu_custom_call.1']
    #allocation7 [shape = 'u8[12288]{0}', space=vmem, size = 0x3000, scoped, tag = 'output window, operand 0, single buffered']
    #allocation8 [shape = 'u8[12288]{0}', space=vmem, size = 0x3000, scoped, tag = 'output window, operand 1, single buffered']
    #allocation9 [shape = 's32[1]{0}', space=sflag, size = 0x4, scoped, tag = 'scoped memory for tpu_custom_call.1']
    %10 = vsyncpa [#allocation3], 0
    %11 = vsyncpa [#allocation6], 0
    %12 = vsyncpa [#allocation4], 0
    %13 = vsyncpa [#allocation9], 0
    // Predicated region
    $region2: #{tpu_custom_call.1} parent=1 // pred_check
      _
    $region3: #{tpu_custom_call.1} parent=1 // pred_check_branch
      %15 = sbr.rel (0) target = $region5
    $region4: #{tpu_custom_call.1} parent=1 // pred_region
      %s16 = sadd.s32 0, 0
      %s18 = ssub.s32 96, 96
      %19 = vsyncadd [#allocation3], %s18
      %s20 = smul.addr %s16, 3
      %s21 = smul.addr %s20, 32
      %s22 = scalar_lea.hbm %s0, %s21
      %s24 = sshll.u32 [#allocation2], 4
      %s25 = int_to_ptr.vmem [resolvable:$true] %s24
      %27 = dma.hbm_to_vmem [thread:$0]  %s22, 96, %s25, [#allocation3]
    $region5: #{tpu_custom_call.1} parent=1 // pred_fallthru
      _
    // Predicated region
    $region6: #{tpu_custom_call.1} parent=1 // pred_check
      _
    $region7: #{tpu_custom_call.1} parent=1 // pred_check_branch
      %29 = sbr.rel (0) target = $region9
    $region8: #{tpu_custom_call.1} parent=1 // pred_region
      %s30 = sadd.s32 0, 0
      %s32 = ssub.s32 96, 96
      %33 = vsyncadd [#allocation6], %s32
      %s34 = smul.addr %s30, 3
      %s35 = smul.addr %s34, 32
      %s36 = scalar_lea.hbm %s1, %s35
      %s38 = sshll.u32 [#allocation5], 4
      %s39 = int_to_ptr.vmem [resolvable:$true] %s38
      %41 = dma.hbm_to_vmem [thread:$0]  %s36, 96, %s39, [#allocation6]
    $region9: #{tpu_custom_call.1} parent=1 // pred_fallthru
      _
    // Predicated region
    $region10: #{tpu_custom_call.1} parent=1 // pred_check
      _
    $region11: #{tpu_custom_call.1} parent=1 // pred_check_branch
      %43 = sbr.rel (0) target = $region13
    $region12: #{tpu_custom_call.1} parent=1 // pred_region
      %s44 = sadd.s32 0, 0
      %p45 = scmp.lt.s32.totalorder %s44, 0
      %s46 = scalar_select %p45, %s44, 0
      %s47 = smul.addr %s46, 3
      %s48 = smul.addr %s47, 2
      %s49 = scalar_lea.vmem %s2, %s48
      %s50 = sadd.s32 0, 0
    $region13: #{tpu_custom_call.1} parent=1 // pred_fallthru
      _
    // Predicated region
    $region14: #{tpu_custom_call.1} parent=1 // pred_check
      _
    $region15: #{tpu_custom_call.1} parent=1 // pred_check_branch
      %52 = sbr.rel (0) target = $region17
    $region16: #{tpu_custom_call.1} parent=1 // pred_region
      %53 = dma.done [#allocation3], 96
    $region17: #{tpu_custom_call.1} parent=1 // pred_fallthru
      _
    // Predicated region
    $region18: #{tpu_custom_call.1} parent=1 // pred_check
      _
    $region19: #{tpu_custom_call.1} parent=1 // pred_check_branch
      %55 = sbr.rel (0) target = $region21
    $region20: #{tpu_custom_call.1} parent=1 // pred_region
      %56 = dma.done [#allocation6], 96
    $region21: #{tpu_custom_call.1} parent=1 // pred_fallthru
      _
    %s57 = sadd.s32 0, 0
    %p58 = scmp.lt.s32.totalorder %s57, 0
    %s59 = scalar_select %p58, %s57, 0
    %s60 = smul.addr %s59, 3
    %s61 = smul.addr %s60, 2
    %s62 = scalar_lea.vmem %s2, %s61
    %s63 = sadd.s32 0, 0
    %s64 = sadd.s32 0, 0
    %s65 = sadd.s32 0, 0
    %p66 = scmp.lt.s32.totalorder %s65, 0
    %s67 = scalar_select %p66, %s65, 0
    %s68 = smul.addr %s67, 3
    %s69 = smul.addr %s68, 2
    %s70 = scalar_lea.vmem %s2, %s69
    %s71 = sadd.s32 0, 0
    %p72 = scmp.eq.s32.totalorder 0, 0
    // Predicated region
    $region22: #{tpu_custom_call.1} parent=1 // pred_check
      %p73 = pneg %p72
    $region23: #{tpu_custom_call.1} parent=1 // pred_check_branch
      %75 = sbr.rel (%p73) target = $region25
    $region24: #{tpu_custom_call.1} parent=1 // pred_region
      %76 = vst [vmem:[#allocation7] sm:$0xff] 0.0
      %77 = vst [vmem:[#allocation7 + $0x8] sm:$0xff] 0.0
      %78 = vst [vmem:[#allocation7 + $0x10] sm:$0xff] 0.0
      %79 = vst [vmem:[#allocation8] sm:$0xff] 0.0
      %80 = vst [vmem:[#allocation8 + $0x8] sm:$0xff] 0.0
      %81 = vst [vmem:[#allocation8 + $0x10] sm:$0xff] 0.0
    $region25: #{tpu_custom_call.1} parent=1 // pred_fallthru
      _
    %v82 = vld [vmem:[#allocation2] sm:$0x3f]
    %v83 = vld [vmem:[#allocation5] sm:$0x3f]
    %v84 = vld [vmem:[%s70] sm:$0x3f]
    %v85 = vsub.f32 %v82, %v83
    %v86 = vld [vmem:[#allocation7] ss:$8 sm:$0x7]
    %v87 = vmul.f32 %v85, %v85
    %v88 = vmul.f32 %v87, %v84
    %v90 = vcombine.high %v88, %v88
    %v92 = vunpack.c.l.s4 1983009808
    %v93 = vunpack.c.0.s8 %v92
    %v94 = vlaneseq
    %v95 = vshrl.u32 %v94, 7
    %v96 = vsub.s32 %v93, %v95
    %v97 = vrot.slane %v88, %v96
    %v99 = vunpack.c.l.s4 1983009808
    %v100 = vunpack.c.0.s8 %v99
    %v101 = vlaneseq
    %v102 = vshrl.u32 %v101, 7
    %v103 = vsub.s32 %v100, %v102
    %v104 = vrot.slane %v90, %v103
    %v105 = vcombine.high %v97, %v97
    %vm109 = vcmask 1041408
    %v110 = vsel %vm109, %v97, 0.0
    %v111 = vrot.slane %v110, 4
    %v112 = vadd.f32 %v110, %v111
    %v113 = vrot.slane %v112, 2
    %v114 = vadd.f32 %v112, %v113
    %v115 = vrot.slane %v114, 1
    %v116 = vadd.f32 %v114, %v115
    %v117 = vsel %vm109, %v105, 0.0
    %v118 = vrot.slane %v117, 4
    %v119 = vadd.f32 %v117, %v118
    %v120 = vrot.slane %v119, 2
    %v121 = vadd.f32 %v119, %v120
    %v122 = vrot.slane %v121, 1
    %v123 = vadd.f32 %v121, %v122
    %v124 = vsel %vm109, %v104, 0.0
    %v125 = vrot.slane %v124, 4
    %v126 = vadd.f32 %v124, %v125
    %v127 = vrot.slane %v126, 2
    %v128 = vadd.f32 %v126, %v127
    %v129 = vrot.slane %v128, 1
    %v130 = vadd.f32 %v128, %v129
    %v134 = vcombine.low %v116, %v123
    %v136 = vunpack.c.l.s4 1966171168
    %v137 = vunpack.c.0.s8 %v136
    %v138 = vlaneseq
    %v139 = vshrl.u32 %v138, 7
    %v140 = vsub.s32 %v137, %v139
    %v141 = vrot.slane %v134, %v140
    %v143 = vunpack.c.l.s4 1966171168
    %v144 = vunpack.c.0.s8 %v143
    %v145 = vlaneseq
    %v146 = vshrl.u32 %v145, 7
    %v147 = vsub.s32 %v144, %v146
    %v148 = vrot.slane %v130, %v147
    %v149 = vcombine.low %v141, %v148
    %v151 = vunpack.c.l.s4 1966171168
    %v152 = vunpack.c.0.s8 %v151
    %v153 = vlaneseq
    %v154 = vshrl.u32 %v153, 7
    %v155 = vsub.s32 %v152, %v154
    %v156 = vrot.slane %v149, %v155
    %v158 = vadd.f32 %v86, %v156
    %v159 = vlaneseq
    %vm160 = vcmp.ge.s32.totalorder %v159, 0
    %vm161 = vcmp.lt.s32.totalorder %v159, 384
    %vm162 = vmand %vm160, %vm161
    %163 = vst.msk [vmem:[#allocation7] ss:$8 sm:$0x7] %vm162, %v158
    %164 = vst.msk [vmem:[#allocation7] ss:$8 sm:$0x0] %vm162, %v158
    %v165 = vld [vmem:[#allocation8] ss:$8 sm:$0x7]
    %v167 = vcombine.high %v84, %v84
    %v169 = vunpack.c.l.s4 1983009808
    %v170 = vunpack.c.0.s8 %v169
    %v171 = vlaneseq
    %v172 = vshrl.u32 %v171, 7
    %v173 = vsub.s32 %v170, %v172
    %v174 = vrot.slane %v84, %v173
    %v176 = vunpack.c.l.s4 1983009808
    %v177 = vunpack.c.0.s8 %v176
    %v178 = vlaneseq
    %v179 = vshrl.u32 %v178, 7
    %v180 = vsub.s32 %v177, %v179
    %v181 = vrot.slane %v167, %v180
    %v182 = vcombine.high %v174, %v174
    %v186 = vsel %vm109, %v174, 0.0
    %v187 = vrot.slane %v186, 4
    %v188 = vadd.f32 %v186, %v187
    %v189 = vrot.slane %v188, 2
    %v190 = vadd.f32 %v188, %v189
    %v191 = vrot.slane %v190, 1
    %v192 = vadd.f32 %v190, %v191
    %v193 = vsel %vm109, %v182, 0.0
    %v194 = vrot.slane %v193, 4
    %v195 = vadd.f32 %v193, %v194
    %v196 = vrot.slane %v195, 2
    %v197 = vadd.f32 %v195, %v196
    %v198 = vrot.slane %v197, 1
    %v199 = vadd.f32 %v197, %v198
    %v200 = vsel %vm109, %v181, 0.0
    %v201 = vrot.slane %v200, 4
    %v202 = vadd.f32 %v200, %v201
    %v203 = vrot.slane %v202, 2
    %v204 = vadd.f32 %v202, %v203
    %v205 = vrot.slane %v204, 1
    %v206 = vadd.f32 %v204, %v205
    %v210 = vcombine.low %v192, %v199
    %v212 = vunpack.c.l.s4 1966171168
    %v213 = vunpack.c.0.s8 %v212
    %v214 = vlaneseq
    %v215 = vshrl.u32 %v214, 7
    %v216 = vsub.s32 %v213, %v215
    %v217 = vrot.slane %v210, %v216
    %v219 = vunpack.c.l.s4 1966171168
    %v220 = vunpack.c.0.s8 %v219
    %v221 = vlaneseq
    %v222 = vshrl.u32 %v221, 7
    %v223 = vsub.s32 %v220, %v222
    %v224 = vrot.slane %v206, %v223
    %v225 = vcombine.low %v217, %v224
    %v227 = vunpack.c.l.s4 1966171168
    %v228 = vunpack.c.0.s8 %v227
    %v229 = vlaneseq
    %v230 = vshrl.u32 %v229, 7
    %v231 = vsub.s32 %v228, %v230
    %v232 = vrot.slane %v225, %v231
    %v234 = vadd.f32 %v165, %v232
    %235 = vst.msk [vmem:[#allocation8] ss:$8 sm:$0x7] %vm162, %v234
    %236 = vst.msk [vmem:[#allocation8] ss:$8 sm:$0x0] %vm162, %v234
    // Predicated region
    $region26: #{tpu_custom_call.1} parent=1 // pred_check
      _
    $region27: #{tpu_custom_call.1} parent=1 // pred_check_branch
      %238 = sbr.rel (0) target = $region29
    $region28: #{tpu_custom_call.1} parent=1 // pred_region
      %s240 = ssub.s32 384, 384
      %241 = vsyncadd [#allocation4], %s240
      %s243 = sshll.u32 [#allocation7], 4
      %s244 = int_to_ptr.vmem [resolvable:$true] %s243
      %246 = dma.vmem_to_hbm [thread:$0]  %s244, 384, %s3, [#allocation4]
    $region29: #{tpu_custom_call.1} parent=1 // pred_fallthru
      _
    // Predicated region
    $region30: #{tpu_custom_call.1} parent=1 // pred_check
      _
    $region31: #{tpu_custom_call.1} parent=1 // pred_check_branch
      %248 = sbr.rel (0) target = $region33
    $region32: #{tpu_custom_call.1} parent=1 // pred_region
      %s250 = ssub.s32 384, 384
      %251 = vsyncadd [#allocation9], %s250
      %s253 = sshll.u32 [#allocation8], 4
      %s254 = int_to_ptr.vmem [resolvable:$true] %s253
      %256 = dma.vmem_to_hbm [thread:$0]  %s254, 384, %s4, [#allocation9]
    $region33: #{tpu_custom_call.1} parent=1 // pred_fallthru
      _
    // Predicated region
    $region34: #{tpu_custom_call.1} parent=1 // pred_check
      _
    $region35: #{tpu_custom_call.1} parent=1 // pred_check_branch
      %258 = sbr.rel (0) target = $region37
    $region36: #{tpu_custom_call.1} parent=1 // pred_region
      %259 = dma.done [#allocation4], 384
    $region37: #{tpu_custom_call.1} parent=1 // pred_fallthru
      _
    // Predicated region
    $region38: #{tpu_custom_call.1} parent=1 // pred_check
      _
    $region39: #{tpu_custom_call.1} parent=1 // pred_check_branch
      %261 = sbr.rel (0) target = $region41
    $region40: #{tpu_custom_call.1} parent=1 // pred_region
      %262 = dma.done [#allocation9], 384
    $region41: #{tpu_custom_call.1} parent=1 // pred_fallthru
      _
    %263 = vsyncpa [#allocation3], 1
    %264 = vsyncpa [#allocation6], 1
    %265 = vsyncpa [#allocation4], 1
    %266 = vsyncpa [#allocation9], 1

</llo_original>
